<compile_context>
chip_gen: v5e
topology: v5e:2x2
jax: 0.10.0
libtpu: 0.0.40
codegen_flags: <defaults>
</compile_context>

<pallas_src>
import functools

import jax
import jax.numpy as jnp
from jax.experimental import pallas as pl
from jax.experimental.pallas import tpu as pltpu


def _msa_kernel(x_ref, wqkv_ref, wout_ref, o_ref, ctx_ref, *,
                n_heads, head_size, bt, seq, hidden):
    # x_ref:    (Bt, N, H)  bf16   current batch tile
    # wqkv_ref: (H, 3*H)    bf16   qkv projection weight (transposed for x @ W)
    # wout_ref: (H, H)      bf16   output projection weight (transposed)
    # o_ref:    (Bt, N, H)  out dtype (f32)
    # ctx_ref:  (Bt*N, H)   bf16   VMEM scratch holding concatenated head outputs

    # Flatten (Bt, N, H) -> (Bt*N, H): lane-dense 2-D tiles for the projections.
    x = x_ref[...].reshape(bt * seq, hidden)

    # --- fused QKV projection on the MXU (bf16 in, f32 accumulate) ---
    qkv = jnp.dot(x, wqkv_ref[...],
                  preferred_element_type=jnp.float32)          # (Bt*N, 3H) f32

    scale = 1.0 / (head_size ** 0.5)
    # Scale q once (Bt*N*H mults) instead of scaling every (N, N) score block.
    q = (qkv[:, 0 * hidden:1 * hidden] * scale).astype(jnp.bfloat16)
    k = qkv[:, 1 * hidden:2 * hidden].astype(jnp.bfloat16)
    v = qkv[:, 2 * hidden:3 * hidden].astype(jnp.bfloat16)

    # Static (unrolled) loop over heads; each head's matmuls are batched over
    # the Bt batch elements so the MXU sees back-to-back work per head.
    for h in range(n_heads):
        lo = h * head_size
        hi = lo + head_size
        # Splitting the leading axis is a sublane-only regroup (no lane moves).
        q_h = q[:, lo:hi].reshape(bt, seq, head_size)           # (Bt, N, d)
        k_h = k[:, lo:hi].reshape(bt, seq, head_size)
        v_h = v[:, lo:hi].reshape(bt, seq, head_size)

        # QK^T with the contraction on the last dim of both operands: the MXU
        # consumes K transposed directly — no explicit k.T / XLU transpose.
        scores = jnp.einsum('bnd,bmd->bnm', q_h, k_h,
                            preferred_element_type=jnp.float32)  # (Bt, N, N)

        # Numerically stable softmax over keys (f32).
        m = jnp.max(scores, axis=-1, keepdims=True)
        e = jnp.exp(scores - m)
        s = jnp.sum(e, axis=-1, keepdims=True)
        attn = e * pl.reciprocal(s, approx=True)                 # (Bt, N, N)

        ctx_h = jnp.einsum('bnm,bmd->bnd', attn.astype(jnp.bfloat16), v_h,
                           preferred_element_type=jnp.float32)   # (Bt, N, d)

        # Write each head straight into its destination slice of the VMEM
        # scratch: no jnp.concatenate, no long-lived per-head vregs.
        ctx_ref[:, lo:hi] = ctx_h.reshape(bt * seq, head_size).astype(jnp.bfloat16)

    # --- output projection (bf16 MXU, f32 accumulate) ---
    out = jnp.dot(ctx_ref[...], wout_ref[...],
                  preferred_element_type=jnp.float32)            # (Bt*N, H)
    o_ref[...] = out.reshape(bt, seq, hidden).astype(o_ref.dtype)
    # Dropout: eval-mode identity.
    # TODO(synk): training-mode dropout (pltpu.prng_seed + stateful_bernoulli).


def msa_forward(x, w_qkv, w_out, *, n_heads, batch_tile=None):
    """x: (B, N, H); w_qkv: (H, 3H); w_out: (H, H). Returns (B, N, H)."""
    B, N, H = x.shape
    assert H % n_heads == 0
    head_size = H // n_heads
    bt = batch_tile if batch_tile is not None else B
    assert B % bt == 0

    # bf16 MXU inputs (accumulation stays f32 inside the kernel). Halves the
    # HBM->VMEM DMA traffic for x and both weights.
    x_bf = x.astype(jnp.bfloat16)
    wqkv_bf = w_qkv.astype(jnp.bfloat16)
    wout_bf = w_out.astype(jnp.bfloat16)

    kernel = functools.partial(_msa_kernel, n_heads=n_heads, head_size=head_size,
                               bt=bt, seq=N, hidden=H)

    return pl.pallas_call(
        kernel,
        out_shape=jax.ShapeDtypeStruct((B, N, H), x.dtype),
        grid_spec=pltpu.PrefetchScalarGridSpec(
            num_scalar_prefetch=0,
            grid=(B // bt,),
            in_specs=[
                pl.BlockSpec((bt, N, H), lambda b: (b, 0, 0)),
                pl.BlockSpec((H, 3 * H), lambda b: (0, 0)),
                pl.BlockSpec((H, H), lambda b: (0, 0)),
            ],
            out_specs=pl.BlockSpec((bt, N, H), lambda b: (b, 0, 0)),
            scratch_shapes=[pltpu.VMEM((bt * N, H), jnp.bfloat16)],
        ),
        compiler_params=pltpu.CompilerParams(
            dimension_semantics=("parallel",),
            vmem_limit_bytes=64 * 1024 * 1024,
        ),
    )(x_bf, wqkv_bf, wout_bf)


def msa_reference(x, w_qkv, w_out, *, n_heads):
    B, N, H = x.shape
    d = H // n_heads
    qkv = x @ w_qkv                                      # (B, N, 3H)
    q, k, v = jnp.split(qkv, 3, axis=-1)

    def to_heads(t):
        return t.reshape(B, N, n_heads, d).transpose(0, 2, 1, 3)  # (B, h, N, d)

    q, k, v = to_heads(q), to_heads(k), to_heads(v)
    scores = jnp.einsum('bhnd,bhmd->bhnm', q, k) / (d ** 0.5)
    attn = jax.nn.softmax(scores, axis=-1)
    ctx = jnp.einsum('bhnm,bhmd->bhnd', attn, v)
    ctx = ctx.transpose(0, 2, 1, 3).reshape(B, N, H)
    return ctx @ w_out


if __name__ == "__main__":
    B, N, hidden, n_heads = 2, 8, 32, 4

    key = jax.random.PRNGKey(0)
    kx, kq, ko = jax.random.split(key, 3)

    x = jax.random.normal(kx, (B, N, hidden), dtype=jnp.float32)
    # nn.Linear weight is (out, in); store the transposed form for x @ W.
    w_qkv = (jax.random.normal(kq, (3 * hidden, hidden), dtype=jnp.float32) * 0.05).T
    w_out = (jax.random.normal(ko, (hidden, hidden), dtype=jnp.float32) * 0.05).T

    out = msa_forward(x, w_qkv, w_out, n_heads=n_heads)
    out = jax.block_until_ready(out)

    ref = msa_reference(x, w_qkv, w_out, n_heads=n_heads)
    assert out.shape == (B, N, hidden)
    # bf16 MXU inputs + approx reciprocal -> relaxed tolerance vs f32 reference.
    assert jnp.allclose(out, ref, atol=1e-2, rtol=1e-2), (
        f"max abs err {jnp.max(jnp.abs(out - ref))}")

    print("KERNEL_OK")
</pallas_src>

<mosaic_0001>
module attributes {stable_mosaic.version = 11 : i64} {
  func.func @_msa_kernel(%arg0: i32, %arg1: memref<2x8x32xbf16, #tpu.memory_space<vmem>>, %arg2: memref<32x96xbf16, #tpu.memory_space<vmem>>, %arg3: memref<32x32xbf16, #tpu.memory_space<vmem>>, %arg4: memref<2x8x32xf32, #tpu.memory_space<vmem>>, %arg5: memref<16x32xbf16, #tpu.memory_space<vmem>>) attributes {dimension_semantics = [#tpu.dimension_semantics<parallel>], iteration_bounds = array<i64: 1>, scalar_prefetch = 0 : i64, scratch_operands = 1 : i64, tpu.core_type = #tpu.core_type<tc>, window_params = [{transform_indices = @transform_0, window_bounds = array<i64: 2, 8, 32>}, {pipeline_mode = #tpu.pipeline_mode<synchronous>, transform_indices = @transform_1, window_bounds = array<i64: 32, 96>}, {pipeline_mode = #tpu.pipeline_mode<synchronous>, transform_indices = @transform_2, window_bounds = array<i64: 32, 32>}, {transform_indices = @transform_3, window_bounds = array<i64: 2, 8, 32>}]} {
    %c0 = arith.constant 0 : index
    %c0_0 = arith.constant 0 : index
    %c0_1 = arith.constant 0 : index
    %0 = vector.load %arg1[%c0, %c0_0, %c0_1] : memref<2x8x32xbf16, #tpu.memory_space<vmem>>, vector<2x8x32xbf16>
    %1 = vector.shape_cast %0 : vector<2x8x32xbf16> to vector<16x32xbf16>
    %c0_2 = arith.constant 0 : index
    %c0_3 = arith.constant 0 : index
    %2 = vector.load %arg2[%c0_2, %c0_3] : memref<32x96xbf16, #tpu.memory_space<vmem>>, vector<32x96xbf16>
    %cst = arith.constant dense<0.000000e+00> : vector<16x96xf32>
    %3 = tpu.matmul %1, %2, %cst {dimension_numbers = #tpu.dot_dimension_numbers<[1], [0], [0], [1], [0, 0, 1, 1], [], []>} : vector<16x32xbf16>, vector<32x96xbf16>, vector<16x96xf32> -> vector<16x96xf32>
    %4 = vector.extract_strided_slice %3 {offsets = [0, 0], sizes = [16, 32], strides = [1, 1]} : vector<16x96xf32> to vector<16x32xf32>
    %cst_4 = arith.constant 0.353553385 : f32
    %5 = vector.broadcast %cst_4 : f32 to vector<16x32xf32>
    %6 = arith.mulf %4, %5 : vector<16x32xf32>
    %7 = arith.truncf %6 : vector<16x32xf32> to vector<16x32xbf16>
    %8 = vector.extract_strided_slice %3 {offsets = [0, 32], sizes = [16, 32], strides = [1, 1]} : vector<16x96xf32> to vector<16x32xf32>
    %9 = arith.truncf %8 : vector<16x32xf32> to vector<16x32xbf16>
    %10 = vector.extract_strided_slice %3 {offsets = [0, 64], sizes = [16, 32], strides = [1, 1]} : vector<16x96xf32> to vector<16x32xf32>
    %11 = arith.truncf %10 : vector<16x32xf32> to vector<16x32xbf16>
    %12 = vector.extract_strided_slice %7 {offsets = [0, 0], sizes = [16, 8], strides = [1, 1]} : vector<16x32xbf16> to vector<16x8xbf16>
    %13 = vector.shape_cast %12 : vector<16x8xbf16> to vector<2x8x8xbf16>
    %14 = vector.extract_strided_slice %9 {offsets = [0, 0], sizes = [16, 8], strides = [1, 1]} : vector<16x32xbf16> to vector<16x8xbf16>
    %15 = vector.shape_cast %14 : vector<16x8xbf16> to vector<2x8x8xbf16>
    %16 = vector.extract_strided_slice %11 {offsets = [0, 0], sizes = [16, 8], strides = [1, 1]} : vector<16x32xbf16> to vector<16x8xbf16>
    %17 = vector.shape_cast %16 : vector<16x8xbf16> to vector<2x8x8xbf16>
    "tpu.trace_start"() <{level = 10 : i32, message = "bnd,bmd->bnm"}> : () -> ()
    %cst_5 = arith.constant dense<0.000000e+00> : vector<2x8x8xf32>
    %18 = tpu.matmul %13, %15, %cst_5 {dimension_numbers = #tpu.dot_dimension_numbers<[2], [2], [1], [1], [0, 0, 0, 1, 1, 1], [0], [0]>} : vector<2x8x8xbf16>, vector<2x8x8xbf16>, vector<2x8x8xf32> -> vector<2x8x8xf32>
    "tpu.trace_stop"() : () -> ()
    %cst_6 = arith.constant dense<0xFF800000> : vector<2x8xf32>
    %19 = vector.multi_reduction <maximumf>, %18, %cst_6 [2] : vector<2x8x8xf32> to vector<2x8xf32>
    %20 = vector.shape_cast %19 : vector<2x8xf32> to vector<2x8x1xf32>
    %21 = vector.broadcast %20 : vector<2x8x1xf32> to vector<2x8x8xf32>
    %22 = arith.subf %18, %21 : vector<2x8x8xf32>
    %23 = math.exp %22 : vector<2x8x8xf32>
    %cst_7 = arith.constant dense<0.000000e+00> : vector<2x8xf32>
    %24 = vector.multi_reduction <add>, %23, %cst_7 [2] : vector<2x8x8xf32> to vector<2x8xf32>
    %25 = vector.shape_cast %24 : vector<2x8xf32> to vector<2x8x1xf32>
    %26 = tpu.reciprocal %25 {approx = true} : vector<2x8x1xf32> -> vector<2x8x1xf32>
    %27 = vector.broadcast %26 : vector<2x8x1xf32> to vector<2x8x8xf32>
    %28 = arith.mulf %23, %27 : vector<2x8x8xf32>
    %29 = arith.truncf %28 : vector<2x8x8xf32> to vector<2x8x8xbf16>
    "tpu.trace_start"() <{level = 10 : i32, message = "bnm,bmd->bnd"}> : () -> ()
    %cst_8 = arith.constant dense<0.000000e+00> : vector<2x8x8xf32>
    %30 = tpu.matmul %29, %17, %cst_8 {dimension_numbers = #tpu.dot_dimension_numbers<[2], [1], [1], [2], [0, 0, 0, 1, 1, 2], [0], [0]>} : vector<2x8x8xbf16>, vector<2x8x8xbf16>, vector<2x8x8xf32> -> vector<2x8x8xf32>
    "tpu.trace_stop"() : () -> ()
    %31 = vector.shape_cast %30 : vector<2x8x8xf32> to vector<16x8xf32>
    %32 = arith.truncf %31 : vector<16x8xf32> to vector<16x8xbf16>
    %c0_9 = arith.constant 0 : index
    %c0_10 = arith.constant 0 : index
    %33 = vector.load %arg5[%c0_9, %c0_10] : memref<16x32xbf16, #tpu.memory_space<vmem>>, vector<16x8xbf16>
    tpu.vector_store %arg5[%c0_9, %c0_10], %32 {strides = array<i32>} : memref<16x32xbf16, #tpu.memory_space<vmem>>, vector<16x8xbf16>,
    %34 = vector.extract_strided_slice %7 {offsets = [0, 8], sizes = [16, 8], strides = [1, 1]} : vector<16x32xbf16> to vector<16x8xbf16>
    %35 = vector.shape_cast %34 : vector<16x8xbf16> to vector<2x8x8xbf16>
    %36 = vector.extract_strided_slice %9 {offsets = [0, 8], sizes = [16, 8], strides = [1, 1]} : vector<16x32xbf16> to vector<16x8xbf16>
    %37 = vector.shape_cast %36 : vector<16x8xbf16> to vector<2x8x8xbf16>
    %38 = vector.extract_strided_slice %11 {offsets = [0, 8], sizes = [16, 8], strides = [1, 1]} : vector<16x32xbf16> to vector<16x8xbf16>
    %39 = vector.shape_cast %38 : vector<16x8xbf16> to vector<2x8x8xbf16>
    "tpu.trace_start"() <{level = 10 : i32, message = "bnd,bmd->bnm"}> : () -> ()
    %cst_11 = arith.constant dense<0.000000e+00> : vector<2x8x8xf32>
    %40 = tpu.matmul %35, %37, %cst_11 {dimension_numbers = #tpu.dot_dimension_numbers<[2], [2], [1], [1], [0, 0, 0, 1, 1, 1], [0], [0]>} : vector<2x8x8xbf16>, vector<2x8x8xbf16>, vector<2x8x8xf32> -> vector<2x8x8xf32>
    "tpu.trace_stop"() : () -> ()
    %cst_12 = arith.constant dense<0xFF800000> : vector<2x8xf32>
    %41 = vector.multi_reduction <maximumf>, %40, %cst_12 [2] : vector<2x8x8xf32> to vector<2x8xf32>
    %42 = vector.shape_cast %41 : vector<2x8xf32> to vector<2x8x1xf32>
    %43 = vector.broadcast %42 : vector<2x8x1xf32> to vector<2x8x8xf32>
    %44 = arith.subf %40, %43 : vector<2x8x8xf32>
    %45 = math.exp %44 : vector<2x8x8xf32>
    %cst_13 = arith.constant dense<0.000000e+00> : vector<2x8xf32>
    %46 = vector.multi_reduction <add>, %45, %cst_13 [2] : vector<2x8x8xf32> to vector<2x8xf32>
    %47 = vector.shape_cast %46 : vector<2x8xf32> to vector<2x8x1xf32>
    %48 = tpu.reciprocal %47 {approx = true} : vector<2x8x1xf32> -> vector<2x8x1xf32>
    %49 = vector.broadcast %48 : vector<2x8x1xf32> to vector<2x8x8xf32>
    %50 = arith.mulf %45, %49 : vector<2x8x8xf32>
    %51 = arith.truncf %50 : vector<2x8x8xf32> to vector<2x8x8xbf16>
    "tpu.trace_start"() <{level = 10 : i32, message = "bnm,bmd->bnd"}> : () -> ()
    %cst_14 = arith.constant dense<0.000000e+00> : vector<2x8x8xf32>
    %52 = tpu.matmul %51, %39, %cst_14 {dimension_numbers = #tpu.dot_dimension_numbers<[2], [1], [1], [2], [0, 0, 0, 1, 1, 2], [0], [0]>} : vector<2x8x8xbf16>, vector<2x8x8xbf16>, vector<2x8x8xf32> -> vector<2x8x8xf32>
    "tpu.trace_stop"() : () -> ()
    %53 = vector.shape_cast %52 : vector<2x8x8xf32> to vector<16x8xf32>
    %54 = arith.truncf %53 : vector<16x8xf32> to vector<16x8xbf16>
    %c0_15 = arith.constant 0 : index
    %c8 = arith.constant 8 : index
    %55 = vector.load %arg5[%c0_15, %c8] : memref<16x32xbf16, #tpu.memory_space<vmem>>, vector<16x8xbf16>
    tpu.vector_store %arg5[%c0_15, %c8], %54 {strides = array<i32>} : memref<16x32xbf16, #tpu.memory_space<vmem>>, vector<16x8xbf16>,
    %56 = vector.extract_strided_slice %7 {offsets = [0, 16], sizes = [16, 8], strides = [1, 1]} : vector<16x32xbf16> to vector<16x8xbf16>
    %57 = vector.shape_cast %56 : vector<16x8xbf16> to vector<2x8x8xbf16>
    %58 = vector.extract_strided_slice %9 {offsets = [0, 16], sizes = [16, 8], strides = [1, 1]} : vector<16x32xbf16> to vector<16x8xbf16>
    %59 = vector.shape_cast %58 : vector<16x8xbf16> to vector<2x8x8xbf16>
    %60 = vector.extract_strided_slice %11 {offsets = [0, 16], sizes = [16, 8], strides = [1, 1]} : vector<16x32xbf16> to vector<16x8xbf16>
    %61 = vector.shape_cast %60 : vector<16x8xbf16> to vector<2x8x8xbf16>
    "tpu.trace_start"() <{level = 10 : i32, message = "bnd,bmd->bnm"}> : () -> ()
    %cst_16 = arith.constant dense<0.000000e+00> : vector<2x8x8xf32>
    %62 = tpu.matmul %57, %59, %cst_16 {dimension_numbers = #tpu.dot_dimension_numbers<[2], [2], [1], [1], [0, 0, 0, 1, 1, 1], [0], [0]>} : vector<2x8x8xbf16>, vector<2x8x8xbf16>, vector<2x8x8xf32> -> vector<2x8x8xf32>
    "tpu.trace_stop"() : () -> ()
    %cst_17 = arith.constant dense<0xFF800000> : vector<2x8xf32>
    %63 = vector.multi_reduction <maximumf>, %62, %cst_17 [2] : vector<2x8x8xf32> to vector<2x8xf32>
    %64 = vector.shape_cast %63 : vector<2x8xf32> to vector<2x8x1xf32>
    %65 = vector.broadcast %64 : vector<2x8x1xf32> to vector<2x8x8xf32>
    %66 = arith.subf %62, %65 : vector<2x8x8xf32>
    %67 = math.exp %66 : vector<2x8x8xf32>
    %cst_18 = arith.constant dense<0.000000e+00> : vector<2x8xf32>
    %68 = vector.multi_reduction <add>, %67, %cst_18 [2] : vector<2x8x8xf32> to vector<2x8xf32>
    %69 = vector.shape_cast %68 : vector<2x8xf32> to vector<2x8x1xf32>
    %70 = tpu.reciprocal %69 {approx = true} : vector<2x8x1xf32> -> vector<2x8x1xf32>
    %71 = vector.broadcast %70 : vector<2x8x1xf32> to vector<2x8x8xf32>
    %72 = arith.mulf %67, %71 : vector<2x8x8xf32>
    %73 = arith.truncf %72 : vector<2x8x8xf32> to vector<2x8x8xbf16>
    "tpu.trace_start"() <{level = 10 : i32, message = "bnm,bmd->bnd"}> : () -> ()
    %cst_19 = arith.constant dense<0.000000e+00> : vector<2x8x8xf32>
    %74 = tpu.matmul %73, %61, %cst_19 {dimension_numbers = #tpu.dot_dimension_numbers<[2], [1], [1], [2], [0, 0, 0, 1, 1, 2], [0], [0]>} : vector<2x8x8xbf16>, vector<2x8x8xbf16>, vector<2x8x8xf32> -> vector<2x8x8xf32>
    "tpu.trace_stop"() : () -> ()
    %75 = vector.shape_cast %74 : vector<2x8x8xf32> to vector<16x8xf32>
    %76 = arith.truncf %75 : vector<16x8xf32> to vector<16x8xbf16>
    %c0_20 = arith.constant 0 : index
    %c16 = arith.constant 16 : index
    %77 = vector.load %arg5[%c0_20, %c16] : memref<16x32xbf16, #tpu.memory_space<vmem>>, vector<16x8xbf16>
    tpu.vector_store %arg5[%c0_20, %c16], %76 {strides = array<i32>} : memref<16x32xbf16, #tpu.memory_space<vmem>>, vector<16x8xbf16>,
    %78 = vector.extract_strided_slice %7 {offsets = [0, 24], sizes = [16, 8], strides = [1, 1]} : vector<16x32xbf16> to vector<16x8xbf16>
    %79 = vector.shape_cast %78 : vector<16x8xbf16> to vector<2x8x8xbf16>
    %80 = vector.extract_strided_slice %9 {offsets = [0, 24], sizes = [16, 8], strides = [1, 1]} : vector<16x32xbf16> to vector<16x8xbf16>
    %81 = vector.shape_cast %80 : vector<16x8xbf16> to vector<2x8x8xbf16>
    %82 = vector.extract_strided_slice %11 {offsets = [0, 24], sizes = [16, 8], strides = [1, 1]} : vector<16x32xbf16> to vector<16x8xbf16>
    %83 = vector.shape_cast %82 : vector<16x8xbf16> to vector<2x8x8xbf16>
    "tpu.trace_start"() <{level = 10 : i32, message = "bnd,bmd->bnm"}> : () -> ()
    %cst_21 = arith.constant dense<0.000000e+00> : vector<2x8x8xf32>
    %84 = tpu.matmul %79, %81, %cst_21 {dimension_numbers = #tpu.dot_dimension_numbers<[2], [2], [1], [1], [0, 0, 0, 1, 1, 1], [0], [0]>} : vector<2x8x8xbf16>, vector<2x8x8xbf16>, vector<2x8x8xf32> -> vector<2x8x8xf32>
    "tpu.trace_stop"() : () -> ()
    %cst_22 = arith.constant dense<0xFF800000> : vector<2x8xf32>
    %85 = vector.multi_reduction <maximumf>, %84, %cst_22 [2] : vector<2x8x8xf32> to vector<2x8xf32>
    %86 = vector.shape_cast %85 : vector<2x8xf32> to vector<2x8x1xf32>
    %87 = vector.broadcast %86 : vector<2x8x1xf32> to vector<2x8x8xf32>
    %88 = arith.subf %84, %87 : vector<2x8x8xf32>
    %89 = math.exp %88 : vector<2x8x8xf32>
    %cst_23 = arith.constant dense<0.000000e+00> : vector<2x8xf32>
    %90 = vector.multi_reduction <add>, %89, %cst_23 [2] : vector<2x8x8xf32> to vector<2x8xf32>
    %91 = vector.shape_cast %90 : vector<2x8xf32> to vector<2x8x1xf32>
    %92 = tpu.reciprocal %91 {approx = true} : vector<2x8x1xf32> -> vector<2x8x1xf32>
    %93 = vector.broadcast %92 : vector<2x8x1xf32> to vector<2x8x8xf32>
    %94 = arith.mulf %89, %93 : vector<2x8x8xf32>
    %95 = arith.truncf %94 : vector<2x8x8xf32> to vector<2x8x8xbf16>
    "tpu.trace_start"() <{level = 10 : i32, message = "bnm,bmd->bnd"}> : () -> ()
    %cst_24 = arith.constant dense<0.000000e+00> : vector<2x8x8xf32>
    %96 = tpu.matmul %95, %83, %cst_24 {dimension_numbers = #tpu.dot_dimension_numbers<[2], [1], [1], [2], [0, 0, 0, 1, 1, 2], [0], [0]>} : vector<2x8x8xbf16>, vector<2x8x8xbf16>, vector<2x8x8xf32> -> vector<2x8x8xf32>
    "tpu.trace_stop"() : () -> ()
    %97 = vector.shape_cast %96 : vector<2x8x8xf32> to vector<16x8xf32>
    %98 = arith.truncf %97 : vector<16x8xf32> to vector<16x8xbf16>
    %c0_25 = arith.constant 0 : index
    %c24 = arith.constant 24 : index
    %99 = vector.load %arg5[%c0_25, %c24] : memref<16x32xbf16, #tpu.memory_space<vmem>>, vector<16x8xbf16>
    tpu.vector_store %arg5[%c0_25, %c24], %98 {strides = array<i32>} : memref<16x32xbf16, #tpu.memory_space<vmem>>, vector<16x8xbf16>,
    %c0_26 = arith.constant 0 : index
    %c0_27 = arith.constant 0 : index
    %100 = vector.load %arg5[%c0_26, %c0_27] : memref<16x32xbf16, #tpu.memory_space<vmem>>, vector<16x32xbf16>
    %c0_28 = arith.constant 0 : index
    %c0_29 = arith.constant 0 : index
    %101 = vector.load %arg3[%c0_28, %c0_29] : memref<32x32xbf16, #tpu.memory_space<vmem>>, vector<32x32xbf16>
    %cst_30 = arith.constant dense<0.000000e+00> : vector<16x32xf32>
    %102 = tpu.matmul %100, %101, %cst_30 {dimension_numbers = #tpu.dot_dimension_numbers<[1], [0], [0], [1], [0, 0, 1, 1], [], []>} : vector<16x32xbf16>, vector<32x32xbf16>, vector<16x32xf32> -> vector<16x32xf32>
    %103 = vector.shape_cast %102 : vector<16x32xf32> to vector<2x8x32xf32>
    %c0_31 = arith.constant 0 : index
    %c0_32 = arith.constant 0 : index
    %c0_33 = arith.constant 0 : index
    %104 = vector.load %arg4[%c0_31, %c0_32, %c0_33] : memref<2x8x32xf32, #tpu.memory_space<vmem>>, vector<2x8x32xf32>
    tpu.vector_store %arg4[%c0_31, %c0_32, %c0_33], %103 {strides = array<i32>} : memref<2x8x32xf32, #tpu.memory_space<vmem>>, vector<2x8x32xf32>,
    return
  }
  func.func @transform_0(%arg0: i32) -> (i32, i32, i32) {
    %c0_i32 = arith.constant 0 : i32
    %c0_i32_0 = arith.constant 0 : i32
    %c0_i32_1 = arith.constant 0 : i32
    return %arg0, %c0_i32, %c0_i32_0 : i32, i32, i32
  }
  func.func @transform_1(%arg0: i32) -> (i32, i32) {
    %c0_i32 = arith.constant 0 : i32
    %c0_i32_0 = arith.constant 0 : i32
    %c0_i32_1 = arith.constant 0 : i32
    return %c0_i32, %c0_i32_0 : i32, i32
  }
  func.func @transform_2(%arg0: i32) -> (i32, i32) {
    %c0_i32 = arith.constant 0 : i32
    %c0_i32_0 = arith.constant 0 : i32
    %c0_i32_1 = arith.constant 0 : i32
    return %c0_i32, %c0_i32_0 : i32, i32
  }
  func.func @transform_3(%arg0: i32) -> (i32, i32, i32) {
    %c0_i32 = arith.constant 0 : i32
    %c0_i32_0 = arith.constant 0 : i32
    %c0_i32_1 = arith.constant 0 : i32
    return %arg0, %c0_i32, %c0_i32_0 : i32, i32, i32
  }
}

</mosaic_0001>

<llo_original>
// kernel: tpu_custom_call.1
$region0: #{tpu_custom_call.1}
  #allocation0 [shape = 'u32[]', space=smem, size = 0x4, offset = 0x4, fixed_abs, tag = 'smem constant byte address 0x4 - core index']
  #allocation1 [shape = 'u32[72,128]{1,0:T(1,128)}', space=vmem, size = 0x9000, scoped, tag = 'internal scratch']
  #allocation2 [shape = 'bf16[16,32]{1,0:T(8,128)(2,1)}', space=vmem, size = 0x1000, scoped, tag = 'scratch operand']
  %s0 = inlined_call_operand.hbm [shape: bf16[2,8,32], index: 0, kind: input, shape index: {}]
  %s1 = inlined_call_operand.hbm [shape: bf16[32,96], index: 1, kind: input, shape index: {}]
  %s2 = inlined_call_operand.hbm [shape: bf16[32,32], index: 2, kind: input, shape index: {}]
  %s3 = inlined_call_operand.hbm [shape: f32[2,8,32], index: 3, kind: output, shape index: {}]
  %s4 = sld [smem:[#allocation0]]
  $region34: #{tpu_custom_call.1} parent=0
    _
  %s6 = ssub.s32 1, %s4
  %s7 = scalar_select 0, %s6, %s4
  $region1: #{tpu_custom_call.1} parent=0
    #allocation3 [shape = 'u8[4096]{0}', space=vmem, size = 0x1000, scoped, tag = 'input window, operand 0, single buffered']
    #allocation4 [shape = 's32[1]{0}', space=sflag, size = 0x4, scoped, tag = 'scoped memory for tpu_custom_call.1']
    #allocation5 [shape = 's32[1]{0}', space=sflag, size = 0x4, scoped, tag = 'scoped memory for tpu_custom_call.1']
    #allocation6 [shape = 'u8[8192]{0}', space=vmem, size = 0x2000, scoped, tag = 'input window, operand 1, single buffered']
    #allocation7 [shape = 's32[1]{0}', space=sflag, size = 0x4, scoped, tag = 'scoped memory for tpu_custom_call.1']
    #allocation8 [shape = 'u8[8192]{0}', space=vmem, size = 0x2000, scoped, tag = 'input window, operand 2, single buffered']
    #allocation9 [shape = 'u8[8192]{0}', space=vmem, size = 0x2000, scoped, tag = 'output window, operand 0, single buffered']
    %8 = vsyncpa [#allocation4], 0
    %9 = vsyncpa [#allocation7], 0
    %10 = vsyncpa [#allocation5], 0
    // Predicated region
    $region2: #{tpu_custom_call.1} parent=1 // pred_check
      _
    $region3: #{tpu_custom_call.1} parent=1 // pred_check_branch
      %12 = sbr.rel (0) target = $region5
    $region4: #{tpu_custom_call.1} parent=1 // pred_region
      %14 = vsyncadd [#allocation4], 0
      %s15 = sshll.u32 %s0, 4
      %s16 = int_to_ptr.hbm [resolvable:$true] %s15
      %s17 = sshll.u32 [#allocation3], 4
      %s18 = int_to_ptr.vmem [resolvable:$true] %s17
      %23 = dma.hbm_to_vmem [thread:$0]  %s16, 128, %s18, [#allocation4], 64, 64, 4
    $region5: #{tpu_custom_call.1} parent=1 // pred_fallthru
      _
    // Predicated region
    $region6: #{tpu_custom_call.1} parent=1 // pred_check
      _
    $region7: #{tpu_custom_call.1} parent=1 // pred_check_branch
      %25 = sbr.rel (0) target = $region9
    $region8: #{tpu_custom_call.1} parent=1 // pred_region
      %27 = vsyncadd [#allocation7], 0
      %s28 = sshll.u32 %s1, 4
      %s29 = int_to_ptr.hbm [resolvable:$true] %s28
      %s30 = sshll.u32 [#allocation6], 4
      %s31 = int_to_ptr.vmem [resolvable:$true] %s30
      %36 = dma.hbm_to_vmem [thread:$0]  %s29, 256, %s31, [#allocation7], 64, 64, 4
    $region9: #{tpu_custom_call.1} parent=1 // pred_fallthru
      _
    // Predicated region
    $region10: #{tpu_custom_call.1} parent=1 // pred_check
      _
    $region11: #{tpu_custom_call.1} parent=1 // pred_check_branch
      %38 = sbr.rel (0) target = $region13
    $region12: #{tpu_custom_call.1} parent=1 // pred_region
      %40 = vsyncadd [#allocation7], 0
      %s41 = sshll.u32 %s2, 4
      %s42 = int_to_ptr.hbm [resolvable:$true] %s41
      %s43 = sshll.u32 [#allocation8], 4
      %s44 = int_to_ptr.vmem [resolvable:$true] %s43
      %49 = dma.hbm_to_vmem [thread:$0]  %s42, 256, %s44, [#allocation7], 64, 64, 4
    $region13: #{tpu_custom_call.1} parent=1 // pred_fallthru
      _
    // Predicated region
    $region14: #{tpu_custom_call.1} parent=1 // pred_check
      _
    $region15: #{tpu_custom_call.1} parent=1 // pred_check_branch
      %51 = sbr.rel (0) target = $region17
    $region16: #{tpu_custom_call.1} parent=1 // pred_region
      %53 = dma.done [#allocation4], 128
    $region17: #{tpu_custom_call.1} parent=1 // pred_fallthru
      _
    // Predicated region
    $region18: #{tpu_custom_call.1} parent=1 // pred_check
      _
    $region19: #{tpu_custom_call.1} parent=1 // pred_check_branch
      %55 = sbr.rel (0) target = $region21
    $region20: #{tpu_custom_call.1} parent=1 // pred_region
      %57 = dma.done [#allocation7], 256
    $region21: #{tpu_custom_call.1} parent=1 // pred_fallthru
      _
    // Predicated region
    $region22: #{tpu_custom_call.1} parent=1 // pred_check
      _
    $region23: #{tpu_custom_call.1} parent=1 // pred_check_branch
      %59 = sbr.rel (0) target = $region25
    $region24: #{tpu_custom_call.1} parent=1 // pred_region
      %61 = dma.done [#allocation7], 256
    $region25: #{tpu_custom_call.1} parent=1 // pred_fallthru
      _
    %v63 = vld [vmem:[#allocation3] sm:$0xf]
    %v64 = vld [vmem:[#allocation3 + $0x4] sm:$0xf]
    %v65 = vld [vmem:[#allocation6] sm:$0xf]
    %v66 = vld [vmem:[#allocation6 + $0x4] sm:$0xf]
    %v67 = vld [vmem:[#allocation6 + $0x8] sm:$0xf]
    %v68 = vld [vmem:[#allocation6 + $0xc] sm:$0xf]
    %v71 = vunpack.c.l.b16 %v63
    %v72 = vunpack.c.l.b16 %v64
    %v73 = vpack.c.b16 %v72, %v71
    %v78 = vunpack.c.l.b16 %v65
    %v79 = vunpack.c.l.b16 %v66
    %v80 = vunpack.c.l.b16 %v67
    %v81 = vunpack.c.l.b16 %v68
    %v82 = vpack.c.b16 %v79, %v78
    %v83 = vpack.c.b16 %v81, %v80
    %vm86 = vcmask 261120
    %v88 = vsel %vm86, %v73, 0
    %90 = vmatpush.bf16.msra.mxu0 0
    %91 = vmatpush.bf16.msra.mxu0 0
    %92 = vmatpush.bf16.msra.mxu0 0
    %93 = vmatpush.bf16.msra.mxu0 0
    %94 = vmatpush.bf16.msra.mxu0 0
    %95 = vmatpush.bf16.msra.mxu0 0
    %96 = vmatpush.bf16.msra.mxu0 %v83
    %97 = vmatpush.bf16.msra.mxu0 %v82
    %98 = vmatmul.bf16.gmra.mxu0 %v88
    %v99 = vpop.f32.mrf.mxu0
    %v100 = vadd.f32 0.0, %v99
    %v101 = vpop.f32.mrf.mxu0
    %v102 = vadd.f32 0.0, %v101
    %103 = vdwg.mxu0
    %v104 = vmul.f32 %v100, 0.35355338
    %v105 = vmul.f32 %v102, 0.35355338
    %v106 = vpack.c.bf16 %v104, %v104
    %v107 = vpack.c.bf16 %v105, %v105
    %v108 = vpack.c.bf16 %v100, %v100
    %v109 = vpack.c.bf16 %v102, %v102
    %v111 = vunpack.c.l.b16 %v108
    %v112 = vpack.c.b16 %v111, %v111
    %113 = vrot.lane.b32.xlu0 %v112, 96
    %v114 = vpop.permute.xlu0 %113
    %vm115 = vcmask 64512
    %v117 = vsel %vm115, %v106, 0
    %v120 = vsel %vm115, %v114, 0
    %122 = vmatpush.bf16.xpose.msra.mxu0 0
    %123 = vmatpush.bf16.xpose.msra.mxu0 0
    %124 = vmatpush.bf16.xpose.msra.mxu0 0
    %125 = vmatpush.bf16.xpose.msra.mxu0 0
    %126 = vmatpush.bf16.xpose.msra.mxu0 0
    %127 = vmatpush.bf16.xpose.msra.mxu0 0
    %128 = vmatpush.bf16.xpose.msra.mxu0 0
    %129 = vmatpush.bf16.xpose.msra.mxu0 %v120
    %130 = vmatmul.bf16.gmra.mxu0 %v117
    %v131 = vpop.f32.mrf.mxu0
    %v132 = vadd.f32 0.0, %v131
    %v133 = vpop.f32.mrf.mxu0
    %134 = vdwg.mxu0
    %v136 = vunpack.c.l.b16 %v109
    %v137 = vpack.c.b16 %v136, %v136
    %138 = vrot.lane.b32.xlu0 %v137, 96
    %v139 = vpop.permute.xlu0 %138
    %v141 = vsel %vm115, %v107, 0
    %v144 = vsel %vm115, %v139, 0
    %146 = vmatpush.bf16.xpose.msra.mxu0 0
    %147 = vmatpush.bf16.xpose.msra.mxu0 0
    %148 = vmatpush.bf16.xpose.msra.mxu0 0
    %149 = vmatpush.bf16.xpose.msra.mxu0 0
    %150 = vmatpush.bf16.xpose.msra.mxu0 0
    %151 = vmatpush.bf16.xpose.msra.mxu0 0
    %152 = vmatpush.bf16.xpose.msra.mxu0 0
    %153 = vmatpush.bf16.xpose.msra.mxu0 %v144
    %154 = vmatmul.bf16.gmra.mxu0 %v141
    %v155 = vpop.f32.mrf.mxu0
    %v156 = vadd.f32 0.0, %v155
    %v157 = vpop.f32.mrf.mxu0
    %158 = vdwg.mxu0
    %v159 = vsel %vm115, %v132, -inf
    %160 = vmax.xlane.f32.xlu0 %v159
    %v161 = vpop.xlane.xlu0 %160
    %v162 = vsel %vm115, %v156, -inf
    %163 = vmax.xlane.f32.xlu0 %v162
    %v164 = vpop.xlane.xlu0 %163
    %v165 = vsub.f32 %v132, %v161
    %v166 = vsub.f32 %v156, %v164
    %v167 = vmul.f32 %v165, 1.442695
    %v168 = vpow.pop %v167
    %v169 = vmul.f32 %v166, 1.442695
    %v170 = vpow.pop %v169
    %v171 = vsel %vm115, %v168, 0.0
    %172 = vadd.xlane.f32.xlu0 %v171
    %v173 = vpop.xlane.xlu0 %172
    %v174 = vsel %vm115, %v170, 0.0
    %175 = vadd.xlane.f32.xlu0 %v174
    %v176 = vpop.xlane.xlu0 %175
    %v177 = vrcp.pop %v173
    %v178 = vrcp.pop %v176
    %v179 = vmul.f32 %v168, %v177
    %v180 = vmul.f32 %v170, %v178
    %v181 = vpack.c.bf16 %v179, %v179
    %v182 = vpack.c.bf16 %v180, %v180
    %183 = vrot.lane.b32.xlu0 %v112, 64
    %v184 = vpop.permute.xlu0 %183
    %v186 = vsel %vm115, %v181, 0
    %vm188 = vcmask 1043456
    %v190 = vsel %vm188, %v184, 0
    %192 = vmatpush.bf16.msra.mxu0 0
    %193 = vmatpush.bf16.msra.mxu0 0
    %194 = vmatpush.bf16.msra.mxu0 0
    %195 = vmatpush.bf16.msra.mxu0 0
    %196 = vmatpush.bf16.msra.mxu0 0
    %197 = vmatpush.bf16.msra.mxu0 0
    %198 = vmatpush.bf16.msra.mxu0 0
    %199 = vmatpush.bf16.msra.mxu0 %v190
    %200 = vmatmul.bf16.gmra.mxu0 %v186
    %v201 = vpop.f32.mrf.mxu0
    %v202 = vadd.f32 0.0, %v201
    %v203 = vpop.f32.mrf.mxu0
    %204 = vdwg.mxu0
    %205 = vrot.lane.b32.xlu0 %v137, 64
    %v206 = vpop.permute.xlu0 %205
    %v208 = vsel %vm115, %v182, 0
    %v211 = vsel %vm188, %v206, 0
    %213 = vmatpush.bf16.msra.mxu0 0
    %214 = vmatpush.bf16.msra.mxu0 0
    %215 = vmatpush.bf16.msra.mxu0 0
    %216 = vmatpush.bf16.msra.mxu0 0
    %217 = vmatpush.bf16.msra.mxu0 0
    %218 = vmatpush.bf16.msra.mxu0 0
    %219 = vmatpush.bf16.msra.mxu0 0
    %220 = vmatpush.bf16.msra.mxu0 %v211
    %221 = vmatmul.bf16.gmra.mxu0 %v208
    %v222 = vpop.f32.mrf.mxu0
    %v223 = vadd.f32 0.0, %v222
    %v224 = vpop.f32.mrf.mxu0
    %225 = vdwg.mxu0
    %v226 = vpack.c.bf16 %v202, %v202
    %v227 = vpack.c.bf16 %v223, %v223
    %vm228 = vcmask 60416
    %229 = vst.msk [vmem:[#allocation2] sm:$0xf] %vm228, %v226
    %230 = vst.msk [vmem:[#allocation2 + $0x4] sm:$0xf] %vm228, %v227
    %v232 = vunpack.c.l.b16 %v106
    %v233 = vpack.c.b16 %v232, %v232
    %234 = vrot.lane.b32.xlu0 %v233, 120
    %v235 = vpop.permute.xlu0 %234
    %236 = vrot.lane.b32.xlu0 %v112, 88
    %v237 = vpop.permute.xlu0 %236
    %v239 = vsel %vm115, %v235, 0
    %v242 = vsel %vm115, %v237, 0
    %244 = vmatpush.bf16.xpose.msra.mxu0 0
    %245 = vmatpush.bf16.xpose.msra.mxu0 0
    %246 = vmatpush.bf16.xpose.msra.mxu0 0
    %247 = vmatpush.bf16.xpose.msra.mxu0 0
    %248 = vmatpush.bf16.xpose.msra.mxu0 0
    %249 = vmatpush.bf16.xpose.msra.mxu0 0
    %250 = vmatpush.bf16.xpose.msra.mxu0 0
    %251 = vmatpush.bf16.xpose.msra.mxu0 %v242
    %252 = vmatmul.bf16.gmra.mxu0 %v239
    %v253 = vpop.f32.mrf.mxu0
    %v254 = vadd.f32 0.0, %v253
    %v255 = vpop.f32.mrf.mxu0
    %256 = vdwg.mxu0
    %v258 = vunpack.c.l.b16 %v107
    %v259 = vpack.c.b16 %v258, %v258
    %260 = vrot.lane.b32.xlu0 %v259, 120
    %v261 = vpop.permute.xlu0 %260
    %262 = vrot.lane.b32.xlu0 %v137, 88
    %v263 = vpop.permute.xlu0 %262
    %v265 = vsel %vm115, %v261, 0
    %v268 = vsel %vm115, %v263, 0
    %270 = vmatpush.bf16.xpose.msra.mxu0 0
    %271 = vmatpush.bf16.xpose.msra.mxu0 0
    %272 = vmatpush.bf16.xpose.msra.mxu0 0
    %273 = vmatpush.bf16.xpose.msra.mxu0 0
    %274 = vmatpush.bf16.xpose.msra.mxu0 0
    %275 = vmatpush.bf16.xpose.msra.mxu0 0
    %276 = vmatpush.bf16.xpose.msra.mxu0 0
    %277 = vmatpush.bf16.xpose.msra.mxu0 %v268
    %278 = vmatmul.bf16.gmra.mxu0 %v265
    %v279 = vpop.f32.mrf.mxu0
    %v280 = vadd.f32 0.0, %v279
    %v281 = vpop.f32.mrf.mxu0
    %282 = vdwg.mxu0
    %v283 = vsel %vm115, %v254, -inf
    %284 = vmax.xlane.f32.xlu0 %v283
    %v285 = vpop.xlane.xlu0 %284
    %v286 = vsel %vm115, %v280, -inf
    %287 = vmax.xlane.f32.xlu0 %v286
    %v288 = vpop.xlane.xlu0 %287
    %v289 = vsub.f32 %v254, %v285
    %v290 = vsub.f32 %v280, %v288
    %v291 = vmul.f32 %v289, 1.442695
    %v292 = vpow.pop %v291
    %v293 = vmul.f32 %v290, 1.442695
    %v294 = vpow.pop %v293
    %v295 = vsel %vm115, %v292, 0.0
    %296 = vadd.xlane.f32.xlu0 %v295
    %v297 = vpop.xlane.xlu0 %296
    %v298 = vsel %vm115, %v294, 0.0
    %299 = vadd.xlane.f32.xlu0 %v298
    %v300 = vpop.xlane.xlu0 %299
    %v301 = vrcp.pop %v297
    %v302 = vrcp.pop %v300
    %v303 = vmul.f32 %v292, %v301
    %v304 = vmul.f32 %v294, %v302
    %v305 = vpack.c.bf16 %v303, %v303
    %v306 = vpack.c.bf16 %v304, %v304
    %307 = vrot.lane.b32.xlu0 %v112, 56
    %v308 = vpop.permute.xlu0 %307
    %v310 = vsel %vm115, %v305, 0
    %v313 = vsel %vm188, %v308, 0
    %315 = vmatpush.bf16.msra.mxu0 0
    %316 = vmatpush.bf16.msra.mxu0 0
    %317 = vmatpush.bf16.msra.mxu0 0
    %318 = vmatpush.bf16.msra.mxu0 0
    %319 = vmatpush.bf16.msra.mxu0 0
    %320 = vmatpush.bf16.msra.mxu0 0
    %321 = vmatpush.bf16.msra.mxu0 0
    %322 = vmatpush.bf16.msra.mxu0 %v313
    %323 = vmatmul.bf16.gmra.mxu0 %v310
    %v324 = vpop.f32.mrf.mxu0
    %v325 = vadd.f32 0.0, %v324
    %v326 = vpop.f32.mrf.mxu0
    %327 = vdwg.mxu0
    %328 = vrot.lane.b32.xlu0 %v137, 56
    %v329 = vpop.permute.xlu0 %328
    %v331 = vsel %vm115, %v306, 0
    %v334 = vsel %vm188, %v329, 0
    %336 = vmatpush.bf16.msra.mxu0 0
    %337 = vmatpush.bf16.msra.mxu0 0
    %338 = vmatpush.bf16.msra.mxu0 0
    %339 = vmatpush.bf16.msra.mxu0 0
    %340 = vmatpush.bf16.msra.mxu0 0
    %341 = vmatpush.bf16.msra.mxu0 0
    %342 = vmatpush.bf16.msra.mxu0 0
    %343 = vmatpush.bf16.msra.mxu0 %v334
    %344 = vmatmul.bf16.gmra.mxu0 %v331
    %v345 = vpop.f32.mrf.mxu0
    %v346 = vadd.f32 0.0, %v345
    %v347 = vpop.f32.mrf.mxu0
    %348 = vdwg.mxu0
    %v349 = vpack.c.bf16 %v325, %v325
    %v350 = vpack.c.bf16 %v346, %v346
    %353 = vrot.lane.b32.xlu0 %v349, 8
    %v354 = vpop.permute.xlu0 %353
    %355 = vrot.lane.b32.xlu0 %v350, 8
    %v356 = vpop.permute.xlu0 %355
    %vm359 = vcmask 126016
    %360 = vst.msk [vmem:[#allocation2] sm:$0xf] %vm359, %v354
    %361 = vst.msk [vmem:[#allocation2 + $0x4] sm:$0xf] %vm359, %v356
    %362 = vrot.lane.b32.xlu0 %v233, 112
    %v363 = vpop.permute.xlu0 %362
    %364 = vrot.lane.b32.xlu0 %v112, 80
    %v365 = vpop.permute.xlu0 %364
    %v367 = vsel %vm115, %v363, 0
    %v370 = vsel %vm115, %v365, 0
    %372 = vmatpush.bf16.xpose.msra.mxu0 0
    %373 = vmatpush.bf16.xpose.msra.mxu0 0
    %374 = vmatpush.bf16.xpose.msra.mxu0 0
    %375 = vmatpush.bf16.xpose.msra.mxu0 0
    %376 = vmatpush.bf16.xpose.msra.mxu0 0
    %377 = vmatpush.bf16.xpose.msra.mxu0 0
    %378 = vmatpush.bf16.xpose.msra.mxu0 0
    %379 = vmatpush.bf16.xpose.msra.mxu0 %v370
    %380 = vmatmul.bf16.gmra.mxu0 %v367
    %v381 = vpop.f32.mrf.mxu0
    %v382 = vadd.f32 0.0, %v381
    %v383 = vpop.f32.mrf.mxu0
    %384 = vdwg.mxu0
    %385 = vrot.lane.b32.xlu0 %v259, 112
    %v386 = vpop.permute.xlu0 %385
    %387 = vrot.lane.b32.xlu0 %v137, 80
    %v388 = vpop.permute.xlu0 %387
    %v390 = vsel %vm115, %v386, 0
    %v393 = vsel %vm115, %v388, 0
    %395 = vmatpush.bf16.xpose.msra.mxu0 0
    %396 = vmatpush.bf16.xpose.msra.mxu0 0
    %397 = vmatpush.bf16.xpose.msra.mxu0 0
    %398 = vmatpush.bf16.xpose.msra.mxu0 0
    %399 = vmatpush.bf16.xpose.msra.mxu0 0
    %400 = vmatpush.bf16.xpose.msra.mxu0 0
    %401 = vmatpush.bf16.xpose.msra.mxu0 0
    %402 = vmatpush.bf16.xpose.msra.mxu0 %v393
    %403 = vmatmul.bf16.gmra.mxu0 %v390
    %v404 = vpop.f32.mrf.mxu0
    %v405 = vadd.f32 0.0, %v404
    %v406 = vpop.f32.mrf.mxu0
    %407 = vdwg.mxu0
    %v408 = vsel %vm115, %v382, -inf
    %409 = vmax.xlane.f32.xlu0 %v408
    %v410 = vpop.xlane.xlu0 %409
    %v411 = vsel %vm115, %v405, -inf
    %412 = vmax.xlane.f32.xlu0 %v411
    %v413 = vpop.xlane.xlu0 %412
    %v414 = vsub.f32 %v382, %v410
    %v415 = vsub.f32 %v405, %v413
    %v416 = vmul.f32 %v414, 1.442695
    %v417 = vpow.pop %v416
    %v418 = vmul.f32 %v415, 1.442695
    %v419 = vpow.pop %v418
    %v420 = vsel %vm115, %v417, 0.0
    %421 = vadd.xlane.f32.xlu0 %v420
    %v422 = vpop.xlane.xlu0 %421
    %v423 = vsel %vm115, %v419, 0.0
    %424 = vadd.xlane.f32.xlu0 %v423
    %v425 = vpop.xlane.xlu0 %424
    %v426 = vrcp.pop %v422
    %v427 = vrcp.pop %v425
    %v428 = vmul.f32 %v417, %v426
    %v429 = vmul.f32 %v419, %v427
    %v430 = vpack.c.bf16 %v428, %v428
    %v431 = vpack.c.bf16 %v429, %v429
    %432 = vrot.lane.b32.xlu0 %v112, 48
    %v433 = vpop.permute.xlu0 %432
    %v435 = vsel %vm115, %v430, 0
    %v438 = vsel %vm188, %v433, 0
    %440 = vmatpush.bf16.msra.mxu0 0
    %441 = vmatpush.bf16.msra.mxu0 0
    %442 = vmatpush.bf16.msra.mxu0 0
    %443 = vmatpush.bf16.msra.mxu0 0
    %444 = vmatpush.bf16.msra.mxu0 0
    %445 = vmatpush.bf16.msra.mxu0 0
    %446 = vmatpush.bf16.msra.mxu0 0
    %447 = vmatpush.bf16.msra.mxu0 %v438
    %448 = vmatmul.bf16.gmra.mxu0 %v435
    %v449 = vpop.f32.mrf.mxu0
    %v450 = vadd.f32 0.0, %v449
    %v451 = vpop.f32.mrf.mxu0
    %452 = vdwg.mxu0
    %453 = vrot.lane.b32.xlu0 %v137, 48
    %v454 = vpop.permute.xlu0 %453
    %v456 = vsel %vm115, %v431, 0
    %v459 = vsel %vm188, %v454, 0
    %461 = vmatpush.bf16.msra.mxu0 0
    %462 = vmatpush.bf16.msra.mxu0 0
    %463 = vmatpush.bf16.msra.mxu0 0
    %464 = vmatpush.bf16.msra.mxu0 0
    %465 = vmatpush.bf16.msra.mxu0 0
    %466 = vmatpush.bf16.msra.mxu0 0
    %467 = vmatpush.bf16.msra.mxu0 0
    %468 = vmatpush.bf16.msra.mxu0 %v459
    %469 = vmatmul.bf16.gmra.mxu0 %v456
    %v470 = vpop.f32.mrf.mxu0
    %v471 = vadd.f32 0.0, %v470
    %v472 = vpop.f32.mrf.mxu0
    %473 = vdwg.mxu0
    %v474 = vpack.c.bf16 %v450, %v450
    %v475 = vpack.c.bf16 %v471, %v471
    %478 = vrot.lane.b32.xlu0 %v474, 16
    %v479 = vpop.permute.xlu0 %478
    %480 = vrot.lane.b32.xlu0 %v475, 16
    %v481 = vpop.permute.xlu0 %480
    %vm484 = vcmask 191616
    %485 = vst.msk [vmem:[#allocation2] sm:$0xf] %vm484, %v479
    %486 = vst.msk [vmem:[#allocation2 + $0x4] sm:$0xf] %vm484, %v481
    %487 = vrot.lane.b32.xlu0 %v233, 104
    %v488 = vpop.permute.xlu0 %487
    %489 = vrot.lane.b32.xlu0 %v112, 72
    %v490 = vpop.permute.xlu0 %489
    %v492 = vsel %vm115, %v488, 0
    %v495 = vsel %vm115, %v490, 0
    %497 = vmatpush.bf16.xpose.msra.mxu0 0
    %498 = vmatpush.bf16.xpose.msra.mxu0 0
    %499 = vmatpush.bf16.xpose.msra.mxu0 0
    %500 = vmatpush.bf16.xpose.msra.mxu0 0
    %501 = vmatpush.bf16.xpose.msra.mxu0 0
    %502 = vmatpush.bf16.xpose.msra.mxu0 0
    %503 = vmatpush.bf16.xpose.msra.mxu0 0
    %504 = vmatpush.bf16.xpose.msra.mxu0 %v495
    %505 = vmatmul.bf16.gmra.mxu0 %v492
    %v506 = vpop.f32.mrf.mxu0
    %v507 = vadd.f32 0.0, %v506
    %v508 = vpop.f32.mrf.mxu0
    %509 = vdwg.mxu0
    %510 = vrot.lane.b32.xlu0 %v259, 104
    %v511 = vpop.permute.xlu0 %510
    %512 = vrot.lane.b32.xlu0 %v137, 72
    %v513 = vpop.permute.xlu0 %512
    %v515 = vsel %vm115, %v511, 0
    %v518 = vsel %vm115, %v513, 0
    %520 = vmatpush.bf16.xpose.msra.mxu0 0
    %521 = vmatpush.bf16.xpose.msra.mxu0 0
    %522 = vmatpush.bf16.xpose.msra.mxu0 0
    %523 = vmatpush.bf16.xpose.msra.mxu0 0
    %524 = vmatpush.bf16.xpose.msra.mxu0 0
    %525 = vmatpush.bf16.xpose.msra.mxu0 0
    %526 = vmatpush.bf16.xpose.msra.mxu0 0
    %527 = vmatpush.bf16.xpose.msra.mxu0 %v518
    %528 = vmatmul.bf16.gmra.mxu0 %v515
    %v529 = vpop.f32.mrf.mxu0
    %v530 = vadd.f32 0.0, %v529
    %v531 = vpop.f32.mrf.mxu0
    %532 = vdwg.mxu0
    %v533 = vsel %vm115, %v507, -inf
    %534 = vmax.xlane.f32.xlu0 %v533
    %v535 = vpop.xlane.xlu0 %534
    %v536 = vsel %vm115, %v530, -inf
    %537 = vmax.xlane.f32.xlu0 %v536
    %v538 = vpop.xlane.xlu0 %537
    %v539 = vsub.f32 %v507, %v535
    %v540 = vsub.f32 %v530, %v538
    %v541 = vmul.f32 %v539, 1.442695
    %v542 = vpow.pop %v541
    %v543 = vmul.f32 %v540, 1.442695
    %v544 = vpow.pop %v543
    %v545 = vsel %vm115, %v542, 0.0
    %546 = vadd.xlane.f32.xlu0 %v545
    %v547 = vpop.xlane.xlu0 %546
    %v548 = vsel %vm115, %v544, 0.0
    %549 = vadd.xlane.f32.xlu0 %v548
    %v550 = vpop.xlane.xlu0 %549
    %v551 = vrcp.pop %v547
    %v552 = vrcp.pop %v550
    %v553 = vmul.f32 %v542, %v551
    %v554 = vmul.f32 %v544, %v552
    %v555 = vpack.c.bf16 %v553, %v553
    %v556 = vpack.c.bf16 %v554, %v554
    %557 = vrot.lane.b32.xlu0 %v112, 40
    %v558 = vpop.permute.xlu0 %557
    %v560 = vsel %vm115, %v555, 0
    %v563 = vsel %vm188, %v558, 0
    %565 = vmatpush.bf16.msra.mxu0 0
    %566 = vmatpush.bf16.msra.mxu0 0
    %567 = vmatpush.bf16.msra.mxu0 0
    %568 = vmatpush.bf16.msra.mxu0 0
    %569 = vmatpush.bf16.msra.mxu0 0
    %570 = vmatpush.bf16.msra.mxu0 0
    %571 = vmatpush.bf16.msra.mxu0 0
    %572 = vmatpush.bf16.msra.mxu0 %v563
    %573 = vmatmul.bf16.gmra.mxu0 %v560
    %v574 = vpop.f32.mrf.mxu0
    %v575 = vadd.f32 0.0, %v574
    %v576 = vpop.f32.mrf.mxu0
    %577 = vdwg.mxu0
    %578 = vrot.lane.b32.xlu0 %v137, 40
    %v579 = vpop.permute.xlu0 %578
    %v581 = vsel %vm115, %v556, 0
    %v584 = vsel %vm188, %v579, 0
    %586 = vmatpush.bf16.msra.mxu0 0
    %587 = vmatpush.bf16.msra.mxu0 0
    %588 = vmatpush.bf16.msra.mxu0 0
    %589 = vmatpush.bf16.msra.mxu0 0
    %590 = vmatpush.bf16.msra.mxu0 0
    %591 = vmatpush.bf16.msra.mxu0 0
    %592 = vmatpush.bf16.msra.mxu0 0
    %593 = vmatpush.bf16.msra.mxu0 %v584
    %594 = vmatmul.bf16.gmra.mxu0 %v581
    %v595 = vpop.f32.mrf.mxu0
    %v596 = vadd.f32 0.0, %v595
    %v597 = vpop.f32.mrf.mxu0
    %598 = vdwg.mxu0
    %v599 = vpack.c.bf16 %v575, %v575
    %v600 = vpack.c.bf16 %v596, %v596
    %603 = vrot.lane.b32.xlu0 %v599, 24
    %v604 = vpop.permute.xlu0 %603
    %605 = vrot.lane.b32.xlu0 %v600, 24
    %v606 = vpop.permute.xlu0 %605
    %vm609 = vcmask 257216
    %610 = vst.msk [vmem:[#allocation2] sm:$0xf] %vm609, %v604
    %611 = vst.msk [vmem:[#allocation2 + $0x4] sm:$0xf] %vm609, %v606
    %v612 = vld [vmem:[#allocation2] sm:$0xf]
    %v613 = vld [vmem:[#allocation2 + $0x4] sm:$0xf]
    %v614 = vld [vmem:[#allocation8] sm:$0xf]
    %v615 = vld [vmem:[#allocation8 + $0x4] sm:$0xf]
    %v616 = vld [vmem:[#allocation8 + $0x8] sm:$0xf]
    %v617 = vld [vmem:[#allocation8 + $0xc] sm:$0xf]
    %v620 = vunpack.c.l.b16 %v612
    %v621 = vunpack.c.l.b16 %v613
    %v622 = vpack.c.b16 %v621, %v620
    %v627 = vunpack.c.l.b16 %v614
    %v628 = vunpack.c.l.b16 %v615
    %v629 = vunpack.c.l.b16 %v616
    %v630 = vunpack.c.l.b16 %v617
    %v631 = vpack.c.b16 %v628, %v627
    %v632 = vpack.c.b16 %v630, %v629
    %v636 = vsel %vm86, %v622, 0
    %638 = vmatpush.bf16.msra.mxu0 0
    %639 = vmatpush.bf16.msra.mxu0 0
    %640 = vmatpush.bf16.msra.mxu0 0
    %641 = vmatpush.bf16.msra.mxu0 0
    %642 = vmatpush.bf16.msra.mxu0 0
    %643 = vmatpush.bf16.msra.mxu0 0
    %644 = vmatpush.bf16.msra.mxu0 %v632
    %645 = vmatpush.bf16.msra.mxu0 %v631
    %646 = vmatmul.bf16.gmra.mxu0 %v636
    %v647 = vpop.f32.mrf.mxu0
    %v648 = vadd.f32 0.0, %v647
    %v649 = vpop.f32.mrf.mxu0
    %v650 = vadd.f32 0.0, %v649
    %651 = vdwg.mxu0
    %652 = vst.msk [vmem:[#allocation9] sm:$0xff] %vm86, %v648
    %653 = vst.msk [vmem:[#allocation9 + $0x8] sm:$0xff] %vm86, %v650
    // Predicated region
    $region26: #{tpu_custom_call.1} parent=1 // pred_check
      _
    $region27: #{tpu_custom_call.1} parent=1 // pred_check_branch
      %655 = sbr.rel (0) target = $region29
    $region28: #{tpu_custom_call.1} parent=1 // pred_region
      %657 = vsyncadd [#allocation5], 0
      %s658 = sshll.u32 [#allocation9], 4
      %s659 = int_to_ptr.vmem [resolvable:$true] %s658
      %s660 = sshll.u32 %s3, 4
      %s661 = int_to_ptr.hbm [resolvable:$true] %s660
      %666 = dma.vmem_to_hbm [thread:$0]  %s659, 256, %s661, [#allocation5], 128, 128, 8
    $region29: #{tpu_custom_call.1} parent=1 // pred_fallthru
      _
    // Predicated region
    $region30: #{tpu_custom_call.1} parent=1 // pred_check
      _
    $region31: #{tpu_custom_call.1} parent=1 // pred_check_branch
      %668 = sbr.rel (0) target = $region33
    $region32: #{tpu_custom_call.1} parent=1 // pred_region
      %670 = dma.done [#allocation5], 256
    $region33: #{tpu_custom_call.1} parent=1 // pred_fallthru
      _
    %671 = vsyncpa [#allocation4], 1
    %672 = vsyncpa [#allocation7], 1
    %673 = vsyncpa [#allocation5], 1

</llo_original>
